<compile_context>
chip_gen: v7x
topology: tpu7x:2x2x1
jax: 0.10.0
libtpu: 0.0.40
codegen_flags: <defaults>
</compile_context>

<pallas_src>
import functools

import jax
import jax.numpy as jnp
from jax.experimental import pallas as pl
from jax.experimental.pallas import tpu as pltpu


def _ru(a, b):
    return (a + b - 1) // b * b


def _pixel_unshuffle_kernel(s_ref, x_ref, o_ref, *, r, tc, th, W, lg, cpad,
                            compute_dtype):
    """One grid step.

    s_ref: (lg*r, r*cpad)    hoisted one-hot lane-deinterleave selector
    x_ref: (tc*th*r, W*r)    input rows ordered (c, h, i)   (i = row phase)
    o_ref: (tc, r*r, th, W)  r^2 output channels per input channel
    """
    rows = tc * th
    n_groups = (W + lg - 1) // lg
    for i in range(r):
        # Row (sublane) de-interleave: one strided load per row phase.
        xi = x_ref[pl.ds(i, rows, stride=r), :].astype(compute_dtype)  # (rows, W*r)
        for g in range(n_groups):
            w0 = g * lg
            wg = min(lg, W - w0)
            # Lane de-interleave: block-diagonal one-hot matmul, K = wg*r only.
            xg = xi[:, w0 * r:(w0 + wg) * r]                       # (rows, wg*r)
            y = jnp.dot(xg, s_ref[:wg * r, :],
                        preferred_element_type=jnp.float32)        # (rows, r*cpad)
            # Regroup rows by channel (free when th is sublane-tile aligned,
            # enforced by _pick_tiles for tc > 1) and cast once per (i, g).
            y = y.reshape(tc, th, r * cpad).astype(o_ref.dtype)
            for j in range(r):
                # Source slice starts at j*cpad (128-aligned); destination
                # slice starts at w0 (multiple of lg); one store per (i, g, j)
                # covers all tc channels -> lane-dense, aligned stores.
                o_ref[:, i * r + j, :, w0:w0 + wg] = y[:, :, j * cpad:j * cpad + wg]


def _vmem_budget():
    """(block budget bytes, vmem_limit_bytes) — generation aware."""
    cap = None
    try:
        cap = getattr(pltpu.get_tpu_info(), "vmem_capacity_bytes", None)
    except Exception:
        cap = None
    if cap is None:
        cap = 64 * 1024 * 1024                  # conservative default (v7x)
    if cap >= 128 * 1024 * 1024:                # v5e / v6e: 128 MiB physical
        return 24 * 1024 * 1024, 96 * 1024 * 1024
    return 14 * 1024 * 1024, 48 * 1024 * 1024   # v7x: 64 MiB physical


def _pick_tiles(N, C, H, r, W, isz, s_bytes, budget, min_steps=8):
    """Pick (tc, th): tc whole channel planes per block (th == H), or tc == 1
    with th rows per block when a single plane exceeds the VMEM budget.

    Accounts for dtype sublane-tile padding, double buffering of both blocks
    and the resident selector, and keeps at least `min_steps` grid steps when
    possible (v7x has 2 TensorCores; the pipeline needs >1 step to overlap)."""
    sub = max(8, 32 // isz)                     # sublane tile rows (8/16/32)
    Wr = W * r

    def fits(tc, th):
        in_b = _ru(tc * th * r, sub) * _ru(Wr, 128) * isz
        out_b = tc * r * r * _ru(th, sub) * _ru(W, 128) * isz
        return 2 * (in_b + out_b) + 2 * s_bytes <= budget

    if fits(1, H):
        # tc > 1 requires H % sub == 0 so the in-kernel (tc*th, .) -> (tc, th, .)
        # regroup of the matmul result is a free, tile-aligned reshape.
        if H % sub == 0:
            tcs = [d for d in range(1, C + 1) if C % d == 0 and fits(d, H)]
        else:
            tcs = [1]
        good = [d for d in tcs if N * (C // d) >= min_steps]
        if good:
            return max(good), H
        # Even tc == 1 yields too few steps: split H to create steps while
        # keeping blocks as large as possible.
        for th in sorted((d for d in range(1, H + 1) if H % d == 0), reverse=True):
            if N * C * (H // th) >= min_steps and fits(1, th):
                return 1, th
        return 1, H
    # A single channel plane exceeds the budget: tc = 1, tile along H.
    ths = [d for d in range(1, H + 1) if H % d == 0 and fits(1, d)]
    if not ths:
        return 1, 1
    th_al = [d for d in ths if d % sub == 0]    # prefer sublane-aligned tiles
    return 1, (max(th_al) if th_al else max(ths))


def pixel_unshuffle(x, downscale_factor):
    """Pallas TPU pixel-unshuffle: (N, C, H*r, W*r) -> (N, C*r^2, H, W)."""
    r = int(downscale_factor)
    if r <= 0:
        raise ValueError(f"downscale_factor must be a positive integer, got {r}")
    if x.ndim != 4:
        raise ValueError(f"expected a 4D (N, C, H, W) input, got shape {x.shape}")
    N, C, Hr, Wr = x.shape
    if Hr % r != 0 or Wr % r != 0:
        raise ValueError(
            f"Input spatial dimensions ({Hr}x{Wr}) must be divisible by "
            f"downscale_factor ({r})")
    if r == 1:
        return x
    H, W = Hr // r, Wr // r

    # bf16 / f32 stay unpromoted (MXU-native, exact with a 0/1 selector);
    # everything else is routed through f32.
    if x.dtype in (jnp.dtype(jnp.bfloat16), jnp.dtype(jnp.float32)):
        compute_dtype = x.dtype
    else:
        compute_dtype = jnp.float32
    isz = jnp.dtype(x.dtype).itemsize

    # Lane-group sizing: 256-wide output groups fill the v6e/v7x 256x256 MXU
    # (128 also fine for v5e's 128x128 MXU); per-phase output columns are
    # padded to a 128-lane boundary so all slices/stores stay lane-aligned.
    if W >= 256 and r <= 4:
        lg = 256
    elif W >= 128:
        lg = 128
    else:
        lg = W
    cpad = max(128, _ru(lg, 128))
    s_bytes = (lg * r) * (r * cpad) * jnp.dtype(compute_dtype).itemsize

    budget, vmem_limit = _vmem_budget()
    tc, th = _pick_tiles(N, C, H, r, W, isz, s_bytes, budget)
    n_cblk, n_hblk = C // tc, H // th

    # Hoisted one-hot selector (built once, DMA'd once, stays VMEM-resident
    # thanks to the constant index_map):
    #   S[l, j*cpad + u] = 1  iff  u < lg  and  l == u*r + j
    l_idx = jax.lax.broadcasted_iota(jnp.int32, (lg * r, r * cpad), 0)
    col = jax.lax.broadcasted_iota(jnp.int32, (lg * r, r * cpad), 1)
    S = jnp.logical_and(col % cpad < lg,
                        l_idx == (col % cpad) * r + col // cpad).astype(compute_dtype)

    # Free reshape: block rows are ordered (c, h, i); the row-phase
    # de-interleave becomes a sublane-strided load inside the kernel.
    xr = x.reshape(N, C * H * r, W * r)

    kernel = functools.partial(
        _pixel_unshuffle_kernel, r=r, tc=tc, th=th, W=W, lg=lg, cpad=cpad,
        compute_dtype=compute_dtype)

    out5 = pl.pallas_call(
        kernel,
        out_shape=jax.ShapeDtypeStruct((N, C, r * r, H, W), x.dtype),
        grid_spec=pltpu.PrefetchScalarGridSpec(
            num_scalar_prefetch=0,
            grid=(N, n_cblk, n_hblk),
            in_specs=[
                # Selector: constant block index -> fetched once, kept resident.
                pl.BlockSpec((lg * r, r * cpad), lambda n, cb, hb: (0, 0)),
                pl.BlockSpec((None, tc * th * r, W * r),
                             lambda n, cb, hb: (n, cb * n_hblk + hb, 0)),
            ],
            out_specs=pl.BlockSpec((None, tc, r * r, th, W),
                                   lambda n, cb, hb: (n, cb, 0, hb, 0)),
        ),
        compiler_params=pltpu.CompilerParams(
            dimension_semantics=("parallel", "parallel", "parallel"),
            vmem_limit_bytes=vmem_limit),
        # NOTE: if an xprof trace on v7x shows exposed DMA at step boundaries,
        # add pipeline_mode=pl.Buffered(3) on the input BlockSpec (re-check the
        # VMEM budget first).
    )(S, xr)

    # Free reshape back to the PixelUnshuffle output layout.
    return out5.reshape(N, C * r * r, H, W)


def _pixel_unshuffle_ref(x, r):
    """Pure-JAX reference (mirrors the PyTorch view/permute/reshape)."""
    N, C, Hr, Wr = x.shape
    H, W = Hr // r, Wr // r
    xv = x.reshape(N, C, H, r, W, r)
    return jnp.transpose(xv, (0, 1, 3, 5, 2, 4)).reshape(N, C * r * r, H, W)


if __name__ == "__main__":
    key = jax.random.PRNGKey(0)
    N, C, r = 2, 4, 2
    H, W = 8, 8

    # Integer-valued f32 in [-128, 128): exactly representable at bf16
    # precision, so the permutation result is bit-exact regardless of the
    # MXU's f32 pass configuration.
    x = jax.random.randint(key, (N, C, H * r, W * r), -128, 128).astype(jnp.float32)

    out = pixel_unshuffle(x, r)
    out = jax.block_until_ready(out)

    ref = _pixel_unshuffle_ref(x, r)
    assert out.shape == (N, C * r * r, H, W), out.shape
    assert out.dtype == x.dtype
    assert jnp.array_equal(out, ref), "mismatch vs reference"

    print("KERNEL_OK")
</pallas_src>

<mosaic_0001>
module attributes {stable_mosaic.version = 11 : i64} {
  func.func @_pixel_unshuffle_kernel(%arg0: i32, %arg1: i32, %arg2: i32, %arg3: memref<16x256xf32, #tpu.memory_space<vmem>>, %arg4: memref<1x16x16xf32, #tpu.memory_space<vmem>>, %arg5: memref<1x1x4x8x8xf32, #tpu.memory_space<vmem>>) attributes {dimension_semantics = [#tpu.dimension_semantics<parallel>, #tpu.dimension_semantics<parallel>, #tpu.dimension_semantics<parallel>], iteration_bounds = array<i64: 2, 4, 1>, scalar_prefetch = 0 : i64, scratch_operands = 0 : i64, tpu.core_type = #tpu.core_type<tc>, window_params = [{pipeline_mode = #tpu.pipeline_mode<synchronous>, transform_indices = @transform_0, window_bounds = array<i64: 16, 256>}, {transform_indices = @transform_1, window_bounds = array<i64: 1, 16, 16>}, {transform_indices = @transform_2, window_bounds = array<i64: 1, 1, 4, 8, 8>}]} {
    %c0 = arith.constant 0 : index
    %c0_0 = arith.constant 0 : index
    %c0_1 = arith.constant 0 : index
    %0 = tpu.strided_load %arg4[%c0, %c0_0, %c0_1] {strides = array<i32: 1, 2, 1>} : memref<1x16x16xf32, #tpu.memory_space<vmem>>, vector<1x8x16xf32>
    %1 = vector.shape_cast %0 : vector<1x8x16xf32> to vector<8x16xf32>
    %c0_2 = arith.constant 0 : index
    %c0_3 = arith.constant 0 : index
    %2 = vector.load %arg3[%c0_2, %c0_3] : memref<16x256xf32, #tpu.memory_space<vmem>>, vector<16x256xf32>
    %cst = arith.constant dense<0.000000e+00> : vector<8x256xf32>
    %3 = tpu.matmul %1, %2, %cst {dimension_numbers = #tpu.dot_dimension_numbers<[1], [0], [0], [1], [0, 0, 1, 1], [], []>} : vector<8x16xf32>, vector<16x256xf32>, vector<8x256xf32> -> vector<8x256xf32>
    %4 = vector.shape_cast %3 : vector<8x256xf32> to vector<1x8x256xf32>
    %5 = vector.extract_strided_slice %4 {offsets = [0, 0, 0], sizes = [1, 8, 8], strides = [1, 1, 1]} : vector<1x8x256xf32> to vector<1x8x8xf32>
    %c0_4 = arith.constant 0 : index
    %c0_5 = arith.constant 0 : index
    %c0_6 = arith.constant 0 : index
    %c0_7 = arith.constant 0 : index
    %c0_8 = arith.constant 0 : index
    %6 = vector.load %arg5[%c0_4, %c0_5, %c0_6, %c0_7, %c0_8] : memref<1x1x4x8x8xf32, #tpu.memory_space<vmem>>, vector<1x1x1x8x8xf32>
    %7 = vector.shape_cast %6 : vector<1x1x1x8x8xf32> to vector<1x8x8xf32>
    %8 = vector.shape_cast %5 : vector<1x8x8xf32> to vector<1x1x1x8x8xf32>
    tpu.vector_store %arg5[%c0_4, %c0_5, %c0_6, %c0_7, %c0_8], %8 {strides = array<i32>} : memref<1x1x4x8x8xf32, #tpu.memory_space<vmem>>, vector<1x1x1x8x8xf32>,
    %9 = vector.extract_strided_slice %4 {offsets = [0, 0, 128], sizes = [1, 8, 8], strides = [1, 1, 1]} : vector<1x8x256xf32> to vector<1x8x8xf32>
    %c0_9 = arith.constant 0 : index
    %c0_10 = arith.constant 0 : index
    %c1 = arith.constant 1 : index
    %c0_11 = arith.constant 0 : index
    %c0_12 = arith.constant 0 : index
    %10 = vector.load %arg5[%c0_9, %c0_10, %c1, %c0_11, %c0_12] : memref<1x1x4x8x8xf32, #tpu.memory_space<vmem>>, vector<1x1x1x8x8xf32>
    %11 = vector.shape_cast %10 : vector<1x1x1x8x8xf32> to vector<1x8x8xf32>
    %12 = vector.shape_cast %9 : vector<1x8x8xf32> to vector<1x1x1x8x8xf32>
    tpu.vector_store %arg5[%c0_9, %c0_10, %c1, %c0_11, %c0_12], %12 {strides = array<i32>} : memref<1x1x4x8x8xf32, #tpu.memory_space<vmem>>, vector<1x1x1x8x8xf32>,
    %c0_13 = arith.constant 0 : index
    %c1_14 = arith.constant 1 : index
    %c0_15 = arith.constant 0 : index
    %13 = tpu.strided_load %arg4[%c0_13, %c1_14, %c0_15] {strides = array<i32: 1, 2, 1>} : memref<1x16x16xf32, #tpu.memory_space<vmem>>, vector<1x8x16xf32>
    %14 = vector.shape_cast %13 : vector<1x8x16xf32> to vector<8x16xf32>
    %c0_16 = arith.constant 0 : index
    %c0_17 = arith.constant 0 : index
    %15 = vector.load %arg3[%c0_16, %c0_17] : memref<16x256xf32, #tpu.memory_space<vmem>>, vector<16x256xf32>
    %cst_18 = arith.constant dense<0.000000e+00> : vector<8x256xf32>
    %16 = tpu.matmul %14, %15, %cst_18 {dimension_numbers = #tpu.dot_dimension_numbers<[1], [0], [0], [1], [0, 0, 1, 1], [], []>} : vector<8x16xf32>, vector<16x256xf32>, vector<8x256xf32> -> vector<8x256xf32>
    %17 = vector.shape_cast %16 : vector<8x256xf32> to vector<1x8x256xf32>
    %18 = vector.extract_strided_slice %17 {offsets = [0, 0, 0], sizes = [1, 8, 8], strides = [1, 1, 1]} : vector<1x8x256xf32> to vector<1x8x8xf32>
    %c0_19 = arith.constant 0 : index
    %c0_20 = arith.constant 0 : index
    %c2 = arith.constant 2 : index
    %c0_21 = arith.constant 0 : index
    %c0_22 = arith.constant 0 : index
    %19 = vector.load %arg5[%c0_19, %c0_20, %c2, %c0_21, %c0_22] : memref<1x1x4x8x8xf32, #tpu.memory_space<vmem>>, vector<1x1x1x8x8xf32>
    %20 = vector.shape_cast %19 : vector<1x1x1x8x8xf32> to vector<1x8x8xf32>
    %21 = vector.shape_cast %18 : vector<1x8x8xf32> to vector<1x1x1x8x8xf32>
    tpu.vector_store %arg5[%c0_19, %c0_20, %c2, %c0_21, %c0_22], %21 {strides = array<i32>} : memref<1x1x4x8x8xf32, #tpu.memory_space<vmem>>, vector<1x1x1x8x8xf32>,
    %22 = vector.extract_strided_slice %17 {offsets = [0, 0, 128], sizes = [1, 8, 8], strides = [1, 1, 1]} : vector<1x8x256xf32> to vector<1x8x8xf32>
    %c0_23 = arith.constant 0 : index
    %c0_24 = arith.constant 0 : index
    %c3 = arith.constant 3 : index
    %c0_25 = arith.constant 0 : index
    %c0_26 = arith.constant 0 : index
    %23 = vector.load %arg5[%c0_23, %c0_24, %c3, %c0_25, %c0_26] : memref<1x1x4x8x8xf32, #tpu.memory_space<vmem>>, vector<1x1x1x8x8xf32>
    %24 = vector.shape_cast %23 : vector<1x1x1x8x8xf32> to vector<1x8x8xf32>
    %25 = vector.shape_cast %22 : vector<1x8x8xf32> to vector<1x1x1x8x8xf32>
    tpu.vector_store %arg5[%c0_23, %c0_24, %c3, %c0_25, %c0_26], %25 {strides = array<i32>} : memref<1x1x4x8x8xf32, #tpu.memory_space<vmem>>, vector<1x1x1x8x8xf32>,
    return
  }
  func.func @transform_0(%arg0: i32, %arg1: i32, %arg2: i32) -> (i32, i32) {
    %c0_i32 = arith.constant 0 : i32
    %c0_i32_0 = arith.constant 0 : i32
    %c0_i32_1 = arith.constant 0 : i32
    return %c0_i32, %c0_i32_0 : i32, i32
  }
  func.func @transform_1(%arg0: i32, %arg1: i32, %arg2: i32) -> (i32, i32, i32) {
    %c1_i32 = arith.constant 1 : i32
    %0 = arith.muli %arg1, %c1_i32 : i32
    %1 = arith.addi %0, %arg2 : i32
    %c0_i32 = arith.constant 0 : i32
    %c0_i32_0 = arith.constant 0 : i32
    return %arg0, %1, %c0_i32 : i32, i32, i32
  }
  func.func @transform_2(%arg0: i32, %arg1: i32, %arg2: i32) -> (i32, i32, i32, i32, i32) {
    %c0_i32 = arith.constant 0 : i32
    %c0_i32_0 = arith.constant 0 : i32
    %c0_i32_1 = arith.constant 0 : i32
    return %arg0, %arg1, %c0_i32, %arg2, %c0_i32_0 : i32, i32, i32, i32, i32
  }
}

</mosaic_0001>

<llo_original>
// kernel: tpu_custom_call.1
$region0: #{tpu_custom_call.1}
  #allocation0 [shape = 'u32[]', space=smem, size = 0x4, offset = 0x4, fixed_abs, tag = 'smem constant byte address 0x4 - core index']
  #allocation1 [shape = 'u32[144,128]{1,0:T(1,128)}', space=vmem, size = 0x12000, scoped, tag = 'internal scratch']
  %s0 = inlined_call_operand.vmem [shape: f32[16,256], index: 0, kind: input, shape index: {}]
  %s1 = inlined_call_operand.vmem [shape: f32[2,64,16], index: 1, kind: input, shape index: {}]
  %s2 = inlined_call_operand.hbm [shape: f32[2,4,4,8,8], index: 2, kind: output, shape index: {}]
  %s3 = sld [smem:[#allocation0]]
  $region41: #{tpu_custom_call.1} parent=0
    _
  %s5 = ssub.s32 1, %s3
  %s6 = scalar_select 0, %s5, %s3
  $region1: #{tpu_custom_call.1} parent=0
    #allocation2 [shape = 'u8[32768]{0}', space=vmem, size = 0x8000, scoped, tag = 'output window, operand 0']
    #allocation3 [shape = 's32[2]{0}', space=sflag, size = 0x8, scoped, tag = 'scoped memory for tpu_custom_call.1']
    %7 = vsyncpa [#allocation3], 0
    %s8 = scalar_lea.sflag [#allocation3], 1
    %9 = vsyncpa %s8, 0
    loop: start=0, step=1, limit=10
    $region2: #{tpu_custom_call.1} parent=1 // loop_pre_header
      _
    $region3: #{tpu_custom_call.1} parent=1 // loop_header
      %s11 = sphi 0, %s15
      %p12 = scmp.ge.s32.totalorder %s11, 10
      %s18 = sphi 0, %s37
      %s19 = sphi 0, %s33
      %s20 = sphi 0, %s29
      %s21 = sphi 0, %s18
      %s22 = sphi 0, %s19
      %s23 = sphi 0, %s20
      %s24 = sphi 0, %s21
      %s25 = sphi 0, %s22
      %s26 = sphi 0, %s23
      %s38 = sphi 0, %s38
      %s40 = sphi 0, %s38
      %s41 = sphi 0, %s40
      %s55 = sphi 0, %s41
      %s65 = sphi 0, %s67
      %s68 = sphi 0, %s65
      %s69 = sphi 0, %s68
      %s85 = sphi 0, %s69
      %s95 = sphi 0, %s97
      %s98 = sphi 0, %s95
      %s99 = sphi 0, %s98
      %s115 = sphi 0, %s99
    $region4: #{tpu_custom_call.1} parent=1 // loop_header_branch
      %14 = sbr.rel (%p12) target = $region8
    $region5: #{tpu_custom_call.1} parent=1 // loop_body
      %s16 = ssub.s32 %s11, 1
      %s17 = ssub.s32 %s11, 2
      %s27 = sadd.s32 1, %s20
      %p28 = scmp.ge.s32.totalorder %s27, 1
      %s29 = scalar_select %p28, 0, %s27
      %s30 = sadd.s32 1, %s19
      %s31 = scalar_select %p28, %s30, %s19
      %p32 = scmp.ge.s32.totalorder %s31, 4
      %s33 = scalar_select %p32, 0, %s31
      %s34 = sadd.s32 1, %s18
      %s35 = scalar_select %p32, %s34, %s18
      %p36 = scmp.ge.s32.totalorder %s35, 2
      %s37 = scalar_select %p36, 0, %s35
      %s39 = sadd.s32 %s38, 1
      %p42 = scmp.eq.s32.totalorder %s11, 7
      %p43 = scmp.ne.s32.totalorder %s38, %s40
      %p44 = scmp.eq.s32.totalorder %s11, 0
      %p45 = por %p43, %p44
      %p46 = scmp.ne.s32.totalorder %s38, %s40
      %p47 = scmp.eq.s32.totalorder %s16, 7
      %p48 = por %p46, %p47
      %p49 = scmp.ne.s32.totalorder %s40, %s41
      %p50 = scmp.eq.s32.totalorder %s16, 0
      %p51 = por %p49, %p50
      %p52 = scmp.ne.s32.totalorder %s40, %s41
      %p53 = scmp.eq.s32.totalorder %s17, 7
      %p54 = por %p52, %p53
      %p56 = scmp.ne.s32.totalorder %s41, %s55
      %p57 = scmp.eq.s32.totalorder %s17, 0
      %p58 = por %p56, %p57
      %s59 = sadd.s32 %s19, %s20
      %s60 = sadd.s32 %s33, %s29
      %s61 = ssub.s32 %s18, %s37
      %s62 = ssub.s32 %s59, %s60
      %s63 = sor.u32 %s61, %s62
      %p64 = scmp.eq.s32.totalorder %s63, 0
      %s66 = sadd.s32 %s65, 1
      %s67 = scalar_select %p64, %s65, %s66
      %p70 = pneg %p64
      %p71 = scmp.eq.s32.totalorder %s11, 7
      %p72 = por %p70, %p71
      %p73 = scmp.ne.s32.totalorder %s65, %s68
      %p74 = scmp.eq.s32.totalorder %s11, 0
      %p75 = por %p73, %p74
      %p76 = scmp.ne.s32.totalorder %s65, %s68
      %p77 = scmp.eq.s32.totalorder %s16, 7
      %p78 = por %p76, %p77
      %p79 = scmp.ne.s32.totalorder %s68, %s69
      %p80 = scmp.eq.s32.totalorder %s16, 0
      %p81 = por %p79, %p80
      %p82 = scmp.ne.s32.totalorder %s68, %s69
      %p83 = scmp.eq.s32.totalorder %s17, 7
      %p84 = por %p82, %p83
      %p86 = scmp.ne.s32.totalorder %s69, %s85
      %p87 = scmp.eq.s32.totalorder %s17, 0
      %p88 = por %p86, %p87
      %s89 = ssub.s32 %s18, %s37
      %s90 = ssub.s32 %s19, %s33
      %s91 = sor.u32 %s89, %s90
      %s92 = ssub.s32 %s20, %s29
      %s93 = sor.u32 %s91, %s92
      %p94 = scmp.eq.s32.totalorder %s93, 0
      %s96 = sadd.s32 %s95, 1
      %s97 = scalar_select %p94, %s95, %s96
      %p100 = pneg %p94
      %p101 = scmp.eq.s32.totalorder %s11, 7
      %p102 = por %p100, %p101
      %p103 = scmp.ne.s32.totalorder %s95, %s98
      %p104 = scmp.eq.s32.totalorder %s11, 0
      %p105 = por %p103, %p104
      %p106 = scmp.ne.s32.totalorder %s95, %s98
      %p107 = scmp.eq.s32.totalorder %s16, 7
      %p108 = por %p106, %p107
      %p109 = scmp.ne.s32.totalorder %s98, %s99
      %p110 = scmp.eq.s32.totalorder %s16, 0
      %p111 = por %p109, %p110
      %p112 = scmp.ne.s32.totalorder %s98, %s99
      %p113 = scmp.eq.s32.totalorder %s17, 7
      %p114 = por %p112, %p113
      %p116 = scmp.ne.s32.totalorder %s99, %s115
      %p117 = scmp.eq.s32.totalorder %s17, 0
      %p118 = por %p116, %p117
      %p119 = scmp.le.s32.totalorder 1, %s11
      %p120 = scmp.lt.s32.totalorder %s11, 9
      %p121 = pnand %p119, %p120
      %p122 = pneg %p121
      // Predicated region
      $region9: #{tpu_custom_call.1} parent=5 // pred_check
        _
      $region10: #{tpu_custom_call.1} parent=5 // pred_check_branch
        %124 = sbr.rel (%p121) target = $region12
      $region11: #{tpu_custom_call.1} parent=5 // pred_region
        %s125 = ssub.s32 %s11, 1
        // Predicated region
        $region13: #{tpu_custom_call.1} parent=11 // pred_check
          %p126 = pneg %p51
        $region14: #{tpu_custom_call.1} parent=11 // pred_check_branch
          %128 = sbr.rel (%p126) target = $region16
        $region15: #{tpu_custom_call.1} parent=11 // pred_region
          _
        $region16: #{tpu_custom_call.1} parent=11 // pred_fallthru
          _
      $region12: #{tpu_custom_call.1} parent=5 // pred_fallthru
        _
      %p129 = scmp.lt.s32.totalorder %s11, 8
      // Predicated region
      $region17: #{tpu_custom_call.1} parent=5 // pred_check
        %p130 = pneg %p129
      $region18: #{tpu_custom_call.1} parent=5 // pred_check_branch
        %132 = sbr.rel (%p130) target = $region20
      $region19: #{tpu_custom_call.1} parent=5 // pred_region
        // Predicated region
        $region21: #{tpu_custom_call.1} parent=19 // pred_check
          %p133 = pneg %p75
        $region22: #{tpu_custom_call.1} parent=19 // pred_check_branch
          %135 = sbr.rel (%p133) target = $region24
        $region23: #{tpu_custom_call.1} parent=19 // pred_region
          %s136 = sadd.s32 %s19, %s20
          %s137 = smul.u32 2, %s136
          %p138 = scmp.lt.s32.totalorder %s18, 1
          %s139 = scalar_select %p138, %s18, 1
          %p140 = scmp.lt.s32.totalorder %s137, 7
          %s141 = scalar_select %p140, %s137, 7
          %s142 = smul.addr %s139, 8
          %s143 = sadd.s32 %s141, %s142
          %s144 = smul.addr %s143, 8
          %s145 = scalar_lea.vmem %s1, %s144
          %s146 = sadd.s32 %s19, %s20
          %s147 = smul.u32 2, %s146
        $region24: #{tpu_custom_call.1} parent=19 // pred_fallthru
          _
      $region20: #{tpu_custom_call.1} parent=5 // pred_fallthru
        _
      %p148 = scmp.le.s32.totalorder 1, %s11
      %p149 = scmp.lt.s32.totalorder %s11, 9
      %p150 = pnand %p148, %p149
      %p151 = pneg %p150
      // Predicated region
      $region25: #{tpu_custom_call.1} parent=5 // pred_check
        _
      $region26: #{tpu_custom_call.1} parent=5 // pred_check_branch
        %153 = sbr.rel (%p150) target = $region28
      $region27: #{tpu_custom_call.1} parent=5 // pred_region
        %s154 = ssub.s32 %s11, 1
        %p155 = pneg %p51
        %p156 = pneg %p48
        %s157 = sadd.s32 %s22, %s23
        %s158 = smul.u32 2, %s157
        %p159 = scmp.lt.s32.totalorder %s21, 1
        %s160 = scalar_select %p159, %s21, 1
        %p161 = scmp.lt.s32.totalorder %s158, 7
        %s162 = scalar_select %p161, %s158, 7
        %s163 = smul.addr %s160, 8
        %s164 = sadd.s32 %s162, %s163
        %s165 = smul.addr %s164, 8
        %s166 = scalar_lea.vmem %s1, %s165
        %p167 = pneg %p81
        %p168 = pneg %p78
        %p169 = pneg %p111
        %p170 = pneg %p108
        %s171 = sand.u32 %s98, 1
        %s172 = scalar_lea.sflag [#allocation3], %s171
        %s173 = sand.u32 %s98, 1
        %s174 = smul.addr %s173, 32
        %s175 = scalar_lea.vmem [#allocation2], %s174
        %s176 = sadd.s32 %s22, %s23
        %s177 = smul.u32 2, %s176
        %p178 = scmp.lt.s32.totalorder %s21, 1
        %s179 = scalar_select %p178, %s21, 1
        %p180 = scmp.lt.s32.totalorder %s177, 7
        %s181 = scalar_select %p180, %s177, 7
        %s182 = smul.addr %s179, 8
        %s183 = sadd.s32 %s181, %s182
        %s184 = smul.addr %s183, 8
        %s185 = scalar_lea.vmem %s1, %s184
        %s186 = sadd.s32 %s22, %s23
        %s187 = smul.u32 2, %s186
        %v188 = vld [vmem:[%s185] ss:$2 sm:$0xff]
        %v189 = vld [vmem:[%s0] sm:$0xff]
        %v190 = vld [vmem:[%s0 + $0x8] sm:$0xff]
        %v191 = vld [vmem:[%s0 + $0x10] sm:$0xff]
        %v192 = vld [vmem:[%s0 + $0x18] sm:$0xff]
        %vm193 = vcmask 130048
        %v195 = vsel %vm193, %v188, 0
        %197 = vmatprep.subr.mxu0 %v190
        %198 = vmatpush1.msra.mxu0 %v189
        %199 = vmatprep.subr.mxu0 %v192
        %200 = vmatpush1.msra.mxu0 %v191
        %201 = vmatprep.subr.mxu0 0.0
        %202 = vmatpush1.msra.mxu0 0.0
        %203 = vmatprep.subr.mxu0 0.0
        %204 = vmatpush1.msra.mxu0 0.0
        %205 = vmatprep.subr.mxu0 0.0
        %206 = vmatpush1.msra.mxu0 0.0
        %207 = vmatprep.subr.mxu0 0.0
        %208 = vmatpush1.msra.mxu0 0.0
        %209 = vmatprep.subr.mxu0 0.0
        %210 = vmatpush1.msra.mxu0 0.0
        %211 = vmatprep.subr.mxu0 0.0
        %212 = vmatpush1.msra.mxu0 0.0
        %213 = vmatprep.subr.mxu0 0.0
        %214 = vmatpush1.msra.mxu0 0.0
        %215 = vmatprep.subr.mxu0 0.0
        %216 = vmatpush1.msra.mxu0 0.0
        %217 = vmatprep.subr.mxu0 0.0
        %218 = vmatpush1.msra.mxu0 0.0
        %219 = vmatprep.subr.mxu0 0.0
        %220 = vmatpush1.msra.mxu0 0.0
        %221 = vmatprep.subr.mxu0 0.0
        %222 = vmatpush1.msra.mxu0 0.0
        %223 = vmatprep.subr.mxu0 0.0
        %224 = vmatpush1.msra.mxu0 0.0
        %225 = vmatprep.subr.mxu0 0.0
        %226 = vmatpush1.msra.mxu0 0.0
        %227 = vmatprep.subr.mxu0 0.0
        %228 = vmatpush1.msra.mxu0 0.0
        %229 = vmatprep.subr.mxu0 0.0
        %230 = vmatpush1.msra.mxu0 0.0
        %231 = vmatprep.subr.mxu0 0.0
        %232 = vmatpush1.msra.mxu0 0.0
        %233 = vmatprep.subr.mxu0 0.0
        %234 = vmatpush1.msra.mxu0 0.0
        %235 = vmatprep.subr.mxu0 0.0
        %236 = vmatpush1.msra.mxu0 0.0
        %237 = vmatprep.subr.mxu0 0.0
        %238 = vmatpush1.msra.mxu0 0.0
        %239 = vmatprep.subr.mxu0 0.0
        %240 = vmatpush1.msra.mxu0 0.0
        %241 = vmatprep.subr.mxu0 0.0
        %242 = vmatpush1.msra.mxu0 0.0
        %243 = vmatprep.subr.mxu0 0.0
        %244 = vmatpush1.msra.mxu0 0.0
        %245 = vmatprep.subr.mxu0 0.0
        %246 = vmatpush1.msra.mxu0 0.0
        %247 = vmatprep.subr.mxu0 0.0
        %248 = vmatpush1.msra.mxu0 0.0
        %249 = vmatprep.subr.mxu0 0.0
        %250 = vmatpush1.msra.mxu0 0.0
        %251 = vmatprep.subr.mxu0 0.0
        %252 = vmatpush1.msra.mxu0 0.0
        %253 = vmatprep.subr.mxu0 0.0
        %254 = vmatpush1.msra.mxu0 0.0
        %255 = vmatprep.subr.mxu0 0.0
        %256 = vmatpush1.msra.mxu0 0.0
        %257 = vmatprep.subr.mxu0 0.0
        %258 = vmatpush1.msra.mxu0 0.0
        %259 = vmatprep.subr.mxu0 0.0
        %260 = vmatpush1.msra.mxu0 0.0
        %261 = vmatprep.mubr.f32.mxu0 0.0
        %262 = vmatmul.mubr.f32.gmra.mrb[0].mxu0 %v195
        %v263 = vpop.f32.mrb[0].mxu0
        %v264 = vadd.f32 0.0, %v263
        %v265 = vpop.f32.mrb[0].mxu0
        %v266 = vadd.f32 0.0, %v265
        %267 = vdwg.mxu0
        %vm268 = vcmask 64512
        %269 = vst.msk [vmem:[%s175] sm:$0xff] %vm268, %v264
        %s270 = scalar_lea.vmem %s175, 8 [#allocation2]
        %271 = vst.msk [vmem:[%s270] sm:$0xff] %vm268, %v266
        %s272 = scalar_lea.vmem %s185, 1
        %v273 = vld [vmem:[%s272] ss:$2 sm:$0xff]
        %v274 = vld [vmem:[%s0] sm:$0xff]
        %v275 = vld [vmem:[%s0 + $0x8] sm:$0xff]
        %v276 = vld [vmem:[%s0 + $0x10] sm:$0xff]
        %v277 = vld [vmem:[%s0 + $0x18] sm:$0xff]
        %v279 = vsel %vm193, %v273, 0
        %281 = vmatprep.subr.mxu0 %v275
        %282 = vmatpush1.msra.mxu0 %v274
        %283 = vmatprep.subr.mxu0 %v277
        %284 = vmatpush1.msra.mxu0 %v276
        %285 = vmatprep.subr.mxu0 0.0
        %286 = vmatpush1.msra.mxu0 0.0
        %287 = vmatprep.subr.mxu0 0.0
        %288 = vmatpush1.msra.mxu0 0.0
        %289 = vmatprep.subr.mxu0 0.0
        %290 = vmatpush1.msra.mxu0 0.0
        %291 = vmatprep.subr.mxu0 0.0
        %292 = vmatpush1.msra.mxu0 0.0
        %293 = vmatprep.subr.mxu0 0.0
        %294 = vmatpush1.msra.mxu0 0.0
        %295 = vmatprep.subr.mxu0 0.0
        %296 = vmatpush1.msra.mxu0 0.0
        %297 = vmatprep.subr.mxu0 0.0
        %298 = vmatpush1.msra.mxu0 0.0
        %299 = vmatprep.subr.mxu0 0.0
        %300 = vmatpush1.msra.mxu0 0.0
        %301 = vmatprep.subr.mxu0 0.0
        %302 = vmatpush1.msra.mxu0 0.0
        %303 = vmatprep.subr.mxu0 0.0
        %304 = vmatpush1.msra.mxu0 0.0
        %305 = vmatprep.subr.mxu0 0.0
        %306 = vmatpush1.msra.mxu0 0.0
        %307 = vmatprep.subr.mxu0 0.0
        %308 = vmatpush1.msra.mxu0 0.0
        %309 = vmatprep.subr.mxu0 0.0
        %310 = vmatpush1.msra.mxu0 0.0
        %311 = vmatprep.subr.mxu0 0.0
        %312 = vmatpush1.msra.mxu0 0.0
        %313 = vmatprep.subr.mxu0 0.0
        %314 = vmatpush1.msra.mxu0 0.0
        %315 = vmatprep.subr.mxu0 0.0
        %316 = vmatpush1.msra.mxu0 0.0
        %317 = vmatprep.subr.mxu0 0.0
        %318 = vmatpush1.msra.mxu0 0.0
        %319 = vmatprep.subr.mxu0 0.0
        %320 = vmatpush1.msra.mxu0 0.0
        %321 = vmatprep.subr.mxu0 0.0
        %322 = vmatpush1.msra.mxu0 0.0
        %323 = vmatprep.subr.mxu0 0.0
        %324 = vmatpush1.msra.mxu0 0.0
        %325 = vmatprep.subr.mxu0 0.0
        %326 = vmatpush1.msra.mxu0 0.0
        %327 = vmatprep.subr.mxu0 0.0
        %328 = vmatpush1.msra.mxu0 0.0
        %329 = vmatprep.subr.mxu0 0.0
        %330 = vmatpush1.msra.mxu0 0.0
        %331 = vmatprep.subr.mxu0 0.0
        %332 = vmatpush1.msra.mxu0 0.0
        %333 = vmatprep.subr.mxu0 0.0
        %334 = vmatpush1.msra.mxu0 0.0
        %335 = vmatprep.subr.mxu0 0.0
        %336 = vmatpush1.msra.mxu0 0.0
        %337 = vmatprep.subr.mxu0 0.0
        %338 = vmatpush1.msra.mxu0 0.0
        %339 = vmatprep.subr.mxu0 0.0
        %340 = vmatpush1.msra.mxu0 0.0
        %341 = vmatprep.subr.mxu0 0.0
        %342 = vmatpush1.msra.mxu0 0.0
        %343 = vmatprep.subr.mxu0 0.0
        %344 = vmatpush1.msra.mxu0 0.0
        %345 = vmatprep.mubr.f32.mxu0 0.0
        %346 = vmatmul.mubr.f32.gmra.mrb[0].mxu0 %v279
        %v347 = vpop.f32.mrb[0].mxu0
        %v348 = vadd.f32 0.0, %v347
        %v349 = vpop.f32.mrb[0].mxu0
        %v350 = vadd.f32 0.0, %v349
        %351 = vdwg.mxu0
        %s352 = scalar_lea.vmem %s175, 16 [#allocation2]
        %353 = vst.msk [vmem:[%s352] sm:$0xff] %vm268, %v348
        %s354 = scalar_lea.vmem %s175, 24 [#allocation2]
        %355 = vst.msk [vmem:[%s354] sm:$0xff] %vm268, %v350
        %s356 = sand.u32 %s98, 1
        %s357 = scalar_lea.sflag [#allocation3], %s356
        %s358 = sand.u32 %s98, 1
        %s359 = smul.addr %s358, 32
        %s360 = scalar_lea.vmem [#allocation2], %s359
        // Predicated region
        $region29: #{tpu_custom_call.1} parent=27 // pred_check
          %p361 = pneg %p108
        $region30: #{tpu_custom_call.1} parent=27 // pred_check_branch
          %363 = sbr.rel (%p361) target = $region32
        $region31: #{tpu_custom_call.1} parent=27 // pred_region
          %s365 = ssub.s32 512, 512
          %366 = vsyncadd %s357, %s365
          %s367 = smul.addr %s22, 4
          %s368 = sadd.s32 %s23, %s367
          %s369 = smul.addr %s21, 16
          %s370 = sadd.s32 %s368, %s369
          %s371 = smul.addr %s370, 128
          %s372 = scalar_lea.hbm %s2, %s371
          %s373 = sshll.u32 %s360, 4
          %s374 = int_to_ptr.vmem [resolvable:$true] %s373
          %379 = dma.vmem_to_hbm [thread:$0]  %s374, 512, %s372, %s357, 128, 128, 8
        $region32: #{tpu_custom_call.1} parent=27 // pred_fallthru
          _
      $region28: #{tpu_custom_call.1} parent=5 // pred_fallthru
        _
      %p380 = scmp.le.s32.totalorder 2, %s11
      // Predicated region
      $region33: #{tpu_custom_call.1} parent=5 // pred_check
        %p381 = pneg %p380
      $region34: #{tpu_custom_call.1} parent=5 // pred_check_branch
        %383 = sbr.rel (%p381) target = $region36
      $region35: #{tpu_custom_call.1} parent=5 // pred_region
        %s384 = ssub.s32 %s11, 2
        // Predicated region
        $region37: #{tpu_custom_call.1} parent=35 // pred_check
          %p385 = pneg %p114
        $region38: #{tpu_custom_call.1} parent=35 // pred_check_branch
          %387 = sbr.rel (%p385) target = $region40
        $region39: #{tpu_custom_call.1} parent=35 // pred_region
          %s388 = sand.u32 %s99, 1
          %s389 = scalar_lea.sflag [#allocation3], %s388
          %s390 = sand.u32 %s99, 1
          %s391 = smul.addr %s390, 32
          %s392 = scalar_lea.vmem [#allocation2], %s391
          %393 = dma.done %s389, 512
        $region40: #{tpu_custom_call.1} parent=35 // pred_fallthru
          _
      $region36: #{tpu_custom_call.1} parent=5 // pred_fallthru
        _
    $region6: #{tpu_custom_call.1} parent=1 // loop_footer
      %s15 = sadd.s32 1, %s11
    $region7: #{tpu_custom_call.1} parent=1 // loop_footer_branch
      %10 = sbr.rel target = $region3
    $region8: #{tpu_custom_call.1} parent=1 // loop_exit
      _
    %394 = vsyncpa [#allocation3], 1
    %s395 = scalar_lea.sflag [#allocation3], 1
    %396 = vsyncpa %s395, 1

</llo_original>
